<compile_context>
chip_gen: v5e
topology: v5e:2x2
jax: 0.10.0
libtpu: 0.0.40
codegen_flags: <defaults>
</compile_context>

<pallas_src>
import functools

import jax
import jax.numpy as jnp
from jax.experimental import pallas as pl
from jax.experimental.pallas import tpu as pltpu


# ----------------------------- Pallas kernel --------------------------------
def _packed_matmul_bias_kernel(p_ref, w_ref, b_ref, o_ref):
    # p_ref: (tr, PACK*K)    patches for PACK*tr output voxels (packed rows)
    # w_ref: (PACK*K, LANE)  block-diagonal weight  (constant block -> resident)
    # b_ref: (1, LANE)       tiled bias             (constant block -> resident)
    # o_ref: (tr, LANE)      lane-dense output (LANE == 128 for Cout == 8)
    acc = jnp.dot(p_ref[...], w_ref[...], preferred_element_type=jnp.float32)
    o_ref[...] = (acc + b_ref[...]).astype(o_ref.dtype)


def _cdiv(a, b):
    return -(-a // b)


def _choose_row_tile(R, target=256):
    """Pick the packed-row tile: large (target 256 packed rows == 4096 voxels),
    a multiple of 8 (sublane alignment), and, when feasible, leaving >= 2 grid
    steps so both v7x TensorCores get sharded work."""
    if R <= 8:
        return max(R, 1)
    tr = min(target, R)
    if _cdiv(R, tr) < 2:        # keep at least 2 grid steps (v7x megacore)
        tr = _cdiv(R, 2)
    tr = max(8, (tr // 8) * 8)  # multiple of 8 for the (8, 128) block rule
    return tr


def conv3d_matmul_pallas(patches, w2d, bias, *, target_packed_rows=256):
    """patches: [M, K], w2d: [K, Cout], bias: [Cout] (f32)  ->  [M, Cout] f32."""
    M, K = patches.shape
    Cout = w2d.shape[1]

    # Pack enough output voxels per row to fill the 128-lane store width.
    PACK = 128 // Cout if (Cout <= 128 and 128 % Cout == 0) else 1
    LANE = PACK * Cout
    Kp = PACK * K

    R = _cdiv(M, PACK)                       # packed rows needed
    tr = _choose_row_tile(R, target_packed_rows)
    R_pad = _cdiv(R, tr) * tr
    M_pad = R_pad * PACK
    if M_pad != M:                           # no M % tile assert: pad + slice
        patches = jnp.pad(patches, ((0, M_pad - M), (0, 0)))
    packed = patches.reshape(R_pad, Kp)      # free contiguous (row-major) view

    # Block-diagonal weight: out[r, v*Cout+co] = sum_k P[PACK*r+v, k] * W[k, co]
    w_big = jnp.kron(jnp.eye(PACK, dtype=w2d.dtype), w2d)           # (Kp, LANE)
    b_big = jnp.tile(bias.astype(jnp.float32), PACK).reshape(1, LANE)

    grid = (R_pad // tr,)
    itemsize = jnp.dtype(packed.dtype).itemsize
    cost = pl.CostEstimate(
        flops=2 * R_pad * Kp * LANE,
        transcendentals=0,
        bytes_accessed=(R_pad * Kp * itemsize       # patch tile reads
                        + Kp * LANE * itemsize      # resident weight (once)
                        + LANE * 4                  # resident bias (once)
                        + R_pad * LANE * 4),        # output writes
    )

    out_packed = pl.pallas_call(
        _packed_matmul_bias_kernel,
        out_shape=jax.ShapeDtypeStruct((R_pad, LANE), jnp.float32),
        grid=grid,
        in_specs=[
            pl.BlockSpec((tr, Kp), lambda i: (i, 0)),
            pl.BlockSpec((Kp, LANE), lambda i: (0, 0)),   # constant -> resident
            pl.BlockSpec((1, LANE), lambda i: (0, 0)),    # constant -> resident
        ],
        out_specs=pl.BlockSpec((tr, LANE), lambda i: (i, 0)),
        compiler_params=pltpu.CompilerParams(
            dimension_semantics=("parallel",)),
        cost_estimate=cost,
    )(packed, w_big, b_big)

    # Free contiguous view back to per-voxel rows; drop padding.
    return out_packed.reshape(M_pad, Cout)[:M]


# ------------------------------- glue (JAX) ----------------------------------
def _im2col_3d(x, ksize, stride, padding):
    """x: [N, C, D, H, W] -> patches [N*Do*Ho*Wo, C*kd*kh*kw] (C-major, then k)."""
    kd, kh, kw = ksize
    sd, sh, sw = stride
    pd, ph, pw = padding
    if pd or ph or pw:
        x = jnp.pad(x, ((0, 0), (0, 0), (pd, pd), (ph, ph), (pw, pw)))
    N, C, D, H, W = x.shape
    Do = (D - kd) // sd + 1
    Ho = (H - kh) // sh + 1
    Wo = (W - kw) // sw + 1

    if (kd, kh, kw) == (sd, sh, sw):
        # Non-overlapping windows: im2col is a pure reshape + transpose.
        xs = x[:, :, :Do * kd, :Ho * kh, :Wo * kw]
        p = xs.reshape(N, C, Do, kd, Ho, kh, Wo, kw)
        p = jnp.transpose(p, (0, 2, 4, 6, 1, 3, 5, 7))    # N,Do,Ho,Wo,C,kd,kh,kw
        patches = p.reshape(N * Do * Ho * Wo, C * kd * kh * kw)
    else:
        # General (possibly overlapping) fallback.
        cols = []
        for i in range(kd):
            for j in range(kh):
                for k in range(kw):
                    cols.append(
                        x[:, :, i:i + sd * Do:sd, j:j + sh * Ho:sh, k:k + sw * Wo:sw])
        p = jnp.stack(cols, axis=2).reshape(N, C * kd * kh * kw, Do, Ho, Wo)
        patches = jnp.transpose(p, (0, 2, 3, 4, 1)).reshape(
            N * Do * Ho * Wo, C * kd * kh * kw)
    return patches, (Do, Ho, Wo)


def downsampling_forward(x, weight, bias, *, stride, padding, compute_dtype=None):
    """Downsampling.forward with pre_norm/post_norm = Identity, pre_permute=False.

    x:      [N, Cin, D, H, W]       (PyTorch NCDHW)
    weight: [Cout, Cin, kd, kh, kw]
    bias:   [Cout]
    returns [N, Do, Ho, Wo, Cout]   (== conv3d output permuted (0,2,3,4,1))

    compute_dtype=jnp.bfloat16 halves input-side HBM bytes on v6e/v7x
    (accumulation stays f32 inside the kernel).
    """
    # TODO(synk): pre_norm/post_norm are nn.Identity for this config; a non-None
    # norm (e.g. LayerNorm over channels) would be fused as a kernel epilogue.
    # TODO(synk): the im2col reshape/transpose still runs as an XLA op (one extra
    # HBM round trip); fully fusing it needs an in-kernel strided de-interleave.
    Cout, Cin, kd, kh, kw = weight.shape
    N = x.shape[0]
    patches, (Do, Ho, Wo) = _im2col_3d(x, (kd, kh, kw), stride, padding)
    w2d = weight.reshape(Cout, Cin * kd * kh * kw).T              # [K, Cout]
    if compute_dtype is not None:
        patches = patches.astype(compute_dtype)
        w2d = w2d.astype(compute_dtype)
    out2d = conv3d_matmul_pallas(patches, w2d, bias.astype(jnp.float32))
    return out2d.reshape(N, Do, Ho, Wo, Cout)


# --------------------------------- main ---------------------------------------
if __name__ == "__main__":
    key = jax.random.PRNGKey(0)
    k_x, k_w, k_b = jax.random.split(key, 3)

    N, Cin, D, H, W = 2, 4, 16, 16, 16
    Cout, ksz, stride, padding = 8, 2, 2, 0

    x = jax.random.normal(k_x, (N, Cin, D, H, W), dtype=jnp.float32)
    weight = 0.1 * jax.random.normal(k_w, (Cout, Cin, ksz, ksz, ksz), dtype=jnp.float32)
    bias = 0.1 * jax.random.normal(k_b, (Cout,), dtype=jnp.float32)

    fwd = jax.jit(functools.partial(
        downsampling_forward, stride=(stride,) * 3, padding=(padding,) * 3))
    out = jax.block_until_ready(fwd(x, weight, bias))

    # Reference: XLA conv (same semantics as torch Conv3d) + permute(0,2,3,4,1).
    ref = jax.lax.conv_general_dilated(
        x, weight, window_strides=(stride,) * 3,
        padding=[(padding, padding)] * 3,
        dimension_numbers=("NCDHW", "OIDHW", "NCDHW"),
    ) + bias.reshape(1, Cout, 1, 1, 1)
    ref = jnp.transpose(ref, (0, 2, 3, 4, 1))

    assert out.shape == ref.shape == (N, D // stride, H // stride, W // stride, Cout)
    assert jnp.allclose(out, ref, atol=1e-5, rtol=1e-5), "mismatch vs reference conv"

    # bf16-input variant (v6e/v7x: halves HBM read bytes); f32 accumulation.
    fwd_bf16 = jax.jit(functools.partial(
        downsampling_forward, stride=(stride,) * 3, padding=(padding,) * 3,
        compute_dtype=jnp.bfloat16))
    out_bf16 = jax.block_until_ready(fwd_bf16(x, weight, bias))
    assert jnp.allclose(out_bf16, ref, atol=3e-2, rtol=3e-2), "bf16 path mismatch"

    print("KERNEL_OK")
</pallas_src>

<mosaic_0001>
module attributes {stable_mosaic.version = 11 : i64} {
  func.func @_packed_matmul_bias_kernel(%arg0: i32, %arg1: memref<32x512xf32, #tpu.memory_space<vmem>>, %arg2: memref<512x128xf32, #tpu.memory_space<vmem>>, %arg3: memref<1x128xf32, #tpu.memory_space<vmem>>, %arg4: memref<32x128xf32, #tpu.memory_space<vmem>>) attributes {dimension_semantics = [#tpu.dimension_semantics<parallel>], iteration_bounds = array<i64: 2>, scalar_prefetch = 0 : i64, scratch_operands = 0 : i64, tpu.core_type = #tpu.core_type<tc>, window_params = [{transform_indices = @transform_0, window_bounds = array<i64: 32, 512>}, {pipeline_mode = #tpu.pipeline_mode<synchronous>, transform_indices = @transform_1, window_bounds = array<i64: 512, 128>}, {pipeline_mode = #tpu.pipeline_mode<synchronous>, transform_indices = @transform_2, window_bounds = array<i64: 1, 128>}, {transform_indices = @transform_3, window_bounds = array<i64: 32, 128>}]} {
    %c0 = arith.constant 0 : index
    %c0_0 = arith.constant 0 : index
    %0 = vector.load %arg1[%c0, %c0_0] : memref<32x512xf32, #tpu.memory_space<vmem>>, vector<32x512xf32>
    %c0_1 = arith.constant 0 : index
    %c0_2 = arith.constant 0 : index
    %1 = vector.load %arg2[%c0_1, %c0_2] : memref<512x128xf32, #tpu.memory_space<vmem>>, vector<512x128xf32>
    %cst = arith.constant dense<0.000000e+00> : vector<32x128xf32>
    %2 = tpu.matmul %0, %1, %cst {dimension_numbers = #tpu.dot_dimension_numbers<[1], [0], [0], [1], [0, 0, 1, 1], [], []>} : vector<32x512xf32>, vector<512x128xf32>, vector<32x128xf32> -> vector<32x128xf32>
    %c0_3 = arith.constant 0 : index
    %c0_4 = arith.constant 0 : index
    %3 = vector.load %arg3[%c0_3, %c0_4] : memref<1x128xf32, #tpu.memory_space<vmem>>, vector<1x128xf32>
    %4 = vector.broadcast %3 : vector<1x128xf32> to vector<32x128xf32>
    %5 = arith.addf %2, %4 : vector<32x128xf32>
    %c0_5 = arith.constant 0 : index
    %c0_6 = arith.constant 0 : index
    %6 = vector.load %arg4[%c0_5, %c0_6] : memref<32x128xf32, #tpu.memory_space<vmem>>, vector<32x128xf32>
    tpu.vector_store %arg4[%c0_5, %c0_6], %5 {strides = array<i32>} : memref<32x128xf32, #tpu.memory_space<vmem>>, vector<32x128xf32>,
    return
  }
  func.func @transform_0(%arg0: i32) -> (i32, i32) {
    %c0_i32 = arith.constant 0 : i32
    %c0_i32_0 = arith.constant 0 : i32
    return %arg0, %c0_i32 : i32, i32
  }
  func.func @transform_1(%arg0: i32) -> (i32, i32) {
    %c0_i32 = arith.constant 0 : i32
    %c0_i32_0 = arith.constant 0 : i32
    %c0_i32_1 = arith.constant 0 : i32
    return %c0_i32, %c0_i32_0 : i32, i32
  }
  func.func @transform_2(%arg0: i32) -> (i32, i32) {
    %c0_i32 = arith.constant 0 : i32
    %c0_i32_0 = arith.constant 0 : i32
    %c0_i32_1 = arith.constant 0 : i32
    return %c0_i32, %c0_i32_0 : i32, i32
  }
  func.func @transform_3(%arg0: i32) -> (i32, i32) {
    %c0_i32 = arith.constant 0 : i32
    %c0_i32_0 = arith.constant 0 : i32
    return %arg0, %c0_i32 : i32, i32
  }
}

</mosaic_0001>

<llo_original>
// kernel: tile.8
$region0: #{tile.8}
  #allocation0 [shape = 's32[1]{0}', space=sflag, size = 0x4, scoped, tag = 'scoped memory for tile.8']
  %s0 = inlined_call_operand.vmem [shape: f32[8], index: 0, kind: input, shape index: {}]
  %s1 = inlined_call_operand.vmem [shape: f32[16,8], index: 1, kind: output, shape index: {}]
  // Predicated region
  $region2: #{tile.8} parent=0 // pred_check
    _
  $region3: #{tile.8} parent=0 // pred_check_branch
    %3 = sbr.rel (0) target = $region5
  $region4: #{tile.8} parent=0 // pred_region
    _
  $region5: #{tile.8} parent=0 // pred_fallthru
    _
  %v4 = vld [vmem:[%s0] ss:$0 sm:$0xff]
  %5 = vst [vmem:[%s1] sm:$0xff] %v4
  %s6 = scalar_lea.vmem %s1, 8
  %7 = vst [vmem:[%s6] sm:$0xff] %v4

// kernel: tile.9
$region0: #{tile.9}
  %s0 = inlined_call_operand.vmem [shape: f32[16,8], index: 0, kind: input, shape index: {}]
  %s1 = inlined_call_operand.vmem [shape: f32[1,128], index: 1, kind: output, shape index: {}]
  $region1: #{tile.9} parent=0
    #allocation0 [shape = 'u8[4096]{0}', space=vmem, size = 0x1000, scoped, tag = 'scoped mem for output reshape']
    %v2 = vld [vmem:[%s0] sm:$0x1]
    %vm3 = vcmask 64512
    %4 = vst.msk [vmem:[#allocation0] sm:$0x1] %vm3, %v2
    %s5 = scalar_lea.vmem %s0, 15
    %v6 = vld [vmem:[%s5] sm:$0x1]
    %7 = vrot.lane.b32.xlu0 %v6, 120
    %v8 = vpop.permute.xlu0 %7
    %vm9 = vcmask 1048512
    %10 = vst.msk [vmem:[#allocation0] sm:$0x1] %vm9, %v8
    %s11 = scalar_lea.vmem %s0, 14
    %v12 = vld [vmem:[%s11] sm:$0x1]
    %13 = vrot.lane.b32.xlu0 %v12, 112
    %v14 = vpop.permute.xlu0 %13
    %vm15 = vcmask 982912
    %16 = vst.msk [vmem:[#allocation0] sm:$0x1] %vm15, %v14
    %s17 = scalar_lea.vmem %s0, 13
    %v18 = vld [vmem:[%s17] sm:$0x1]
    %19 = vrot.lane.b32.xlu0 %v18, 104
    %v20 = vpop.permute.xlu0 %19
    %vm21 = vcmask 917312
    %22 = vst.msk [vmem:[#allocation0] sm:$0x1] %vm21, %v20
    %s23 = scalar_lea.vmem %s0, 12
    %v24 = vld [vmem:[%s23] sm:$0x1]
    %25 = vrot.lane.b32.xlu0 %v24, 96
    %v26 = vpop.permute.xlu0 %25
    %vm27 = vcmask 851712
    %28 = vst.msk [vmem:[#allocation0] sm:$0x1] %vm27, %v26
    %s29 = scalar_lea.vmem %s0, 11
    %v30 = vld [vmem:[%s29] sm:$0x1]
    %31 = vrot.lane.b32.xlu0 %v30, 88
    %v32 = vpop.permute.xlu0 %31
    %vm33 = vcmask 786112
    %34 = vst.msk [vmem:[#allocation0] sm:$0x1] %vm33, %v32
    %s35 = scalar_lea.vmem %s0, 10
    %v36 = vld [vmem:[%s35] sm:$0x1]
    %37 = vrot.lane.b32.xlu0 %v36, 80
    %v38 = vpop.permute.xlu0 %37
    %vm39 = vcmask 720512
    %40 = vst.msk [vmem:[#allocation0] sm:$0x1] %vm39, %v38
    %s41 = scalar_lea.vmem %s0, 9
    %v42 = vld [vmem:[%s41] sm:$0x1]
    %43 = vrot.lane.b32.xlu0 %v42, 72
    %v44 = vpop.permute.xlu0 %43
    %vm45 = vcmask 654912
    %46 = vst.msk [vmem:[#allocation0] sm:$0x1] %vm45, %v44
    %s47 = scalar_lea.vmem %s0, 8
    %v48 = vld [vmem:[%s47] sm:$0x1]
    %49 = vrot.lane.b32.xlu0 %v48, 64
    %v50 = vpop.permute.xlu0 %49
    %vm51 = vcmask 589312
    %52 = vst.msk [vmem:[#allocation0] sm:$0x1] %vm51, %v50
    %s53 = scalar_lea.vmem %s0, 7
    %v54 = vld [vmem:[%s53] sm:$0x1]
    %55 = vrot.lane.b32.xlu0 %v54, 56
    %v56 = vpop.permute.xlu0 %55
    %vm57 = vcmask 523712
    %58 = vst.msk [vmem:[#allocation0] sm:$0x1] %vm57, %v56
    %s59 = scalar_lea.vmem %s0, 6
    %v60 = vld [vmem:[%s59] sm:$0x1]
    %61 = vrot.lane.b32.xlu0 %v60, 48
    %v62 = vpop.permute.xlu0 %61
    %vm63 = vcmask 458112
    %64 = vst.msk [vmem:[#allocation0] sm:$0x1] %vm63, %v62
    %s65 = scalar_lea.vmem %s0, 5
    %v66 = vld [vmem:[%s65] sm:$0x1]
    %67 = vrot.lane.b32.xlu0 %v66, 40
    %v68 = vpop.permute.xlu0 %67
    %vm69 = vcmask 392512
    %70 = vst.msk [vmem:[#allocation0] sm:$0x1] %vm69, %v68
    %s71 = scalar_lea.vmem %s0, 4
    %v72 = vld [vmem:[%s71] sm:$0x1]
    %73 = vrot.lane.b32.xlu0 %v72, 32
    %v74 = vpop.permute.xlu0 %73
    %vm75 = vcmask 326912
    %76 = vst.msk [vmem:[#allocation0] sm:$0x1] %vm75, %v74
    %s77 = scalar_lea.vmem %s0, 3
    %v78 = vld [vmem:[%s77] sm:$0x1]
    %79 = vrot.lane.b32.xlu0 %v78, 24
    %v80 = vpop.permute.xlu0 %79
    %vm81 = vcmask 261312
    %82 = vst.msk [vmem:[#allocation0] sm:$0x1] %vm81, %v80
    %s83 = scalar_lea.vmem %s0, 2
    %v84 = vld [vmem:[%s83] sm:$0x1]
    %85 = vrot.lane.b32.xlu0 %v84, 16
    %v86 = vpop.permute.xlu0 %85
    %vm87 = vcmask 195712
    %88 = vst.msk [vmem:[#allocation0] sm:$0x1] %vm87, %v86
    %s89 = scalar_lea.vmem %s0, 1
    %v90 = vld [vmem:[%s89] sm:$0x1]
    %91 = vrot.lane.b32.xlu0 %v90, 8
    %v92 = vpop.permute.xlu0 %91
    %vm93 = vcmask 130112
    %94 = vst.msk [vmem:[#allocation0] sm:$0x1] %vm93, %v92
    %s96 = ssub.s32 2, 1
    %v97 = vld [vmem:[#allocation0] sm:%s96]
    %s99 = ssub.s32 2, 1
    %100 = vst [vmem:[%s1] sm:%s99] %v97

// kernel: downsampling_forward.1
$region0: #{downsampling_forward.1}
  #allocation0 [shape = 'u32[]', space=smem, size = 0x4, offset = 0x4, fixed_abs, tag = 'smem constant byte address 0x4 - core index']
  #allocation1 [shape = 'u32[72,128]{1,0:T(1,128)}', space=vmem, size = 0x9000, scoped, tag = 'internal scratch']
  %s0 = inlined_call_operand.vmem [shape: f32[64,512], index: 0, kind: input, shape index: {}]
  %s1 = inlined_call_operand.vmem [shape: f32[512,128], index: 1, kind: input, shape index: {}]
  %s2 = inlined_call_operand.vmem [shape: f32[1,128], index: 2, kind: input, shape index: {}]
  %s3 = inlined_call_operand.vmem [shape: f32[64,128], index: 3, kind: output, shape index: {}]
  %s4 = sld [smem:[#allocation0]]
  $region45: #{downsampling_forward.1} parent=0
    _
  %s6 = ssub.s32 1, %s4
  %s7 = scalar_select 0, %s6, %s4
  loop: start=0, step=1, limit=4
  $region2: #{downsampling_forward.1} parent=0 // loop_pre_header
    _
  $region3: #{downsampling_forward.1} parent=0 // loop_header
    %s9 = sphi 0, %s13
    %p10 = scmp.ge.s32.totalorder %s9, 4
    %s19 = sphi 0, %s21
    %s22 = sphi 0, %s19
    %s23 = sphi 0, %s22
    %s39 = sphi 0, %s23
    %s43 = sphi 0, %s43
    %s45 = sphi 0, %s43
    %s46 = sphi 0, %s45
    %s60 = sphi 0, %s46
    %s64 = sphi 0, %s64
    %s66 = sphi 0, %s64
    %s67 = sphi 0, %s66
    %s81 = sphi 0, %s67
    %s87 = sphi 0, %s89
    %s90 = sphi 0, %s87
    %s91 = sphi 0, %s90
    %s107 = sphi 0, %s91
  $region4: #{downsampling_forward.1} parent=0 // loop_header_branch
    %12 = sbr.rel (%p10) target = $region8
  $region5: #{downsampling_forward.1} parent=0 // loop_body
    %s14 = ssub.s32 %s9, 1
    %s15 = ssub.s32 %s9, 2
    %s16 = sadd.s32 %s9, 1
    %s17 = ssub.s32 %s9, %s16
    %p18 = scmp.eq.s32.totalorder %s17, 0
    %s20 = sadd.s32 %s19, 1
    %s21 = scalar_select %p18, %s19, %s20
    %p24 = pneg %p18
    %p25 = scmp.eq.s32.totalorder %s9, 1
    %p26 = por %p24, %p25
    %p27 = scmp.ne.s32.totalorder %s19, %s22
    %p28 = scmp.eq.s32.totalorder %s9, 0
    %p29 = por %p27, %p28
    %p30 = scmp.ne.s32.totalorder %s19, %s22
    %p31 = scmp.eq.s32.totalorder %s14, 1
    %p32 = por %p30, %p31
    %p33 = scmp.ne.s32.totalorder %s22, %s23
    %p34 = scmp.eq.s32.totalorder %s14, 0
    %p35 = por %p33, %p34
    %p36 = scmp.ne.s32.totalorder %s22, %s23
    %p37 = scmp.eq.s32.totalorder %s15, 1
    %p38 = por %p36, %p37
    %p40 = scmp.ne.s32.totalorder %s23, %s39
    %p41 = scmp.eq.s32.totalorder %s15, 0
    %p42 = por %p40, %p41
    %s44 = sadd.s32 %s43, 1
    %p47 = scmp.eq.s32.totalorder %s9, 1
    %p48 = scmp.ne.s32.totalorder %s43, %s45
    %p49 = scmp.eq.s32.totalorder %s9, 0
    %p50 = por %p48, %p49
    %p51 = scmp.ne.s32.totalorder %s43, %s45
    %p52 = scmp.eq.s32.totalorder %s14, 1
    %p53 = por %p51, %p52
    %p54 = scmp.ne.s32.totalorder %s45, %s46
    %p55 = scmp.eq.s32.totalorder %s14, 0
    %p56 = por %p54, %p55
    %p57 = scmp.ne.s32.totalorder %s45, %s46
    %p58 = scmp.eq.s32.totalorder %s15, 1
    %p59 = por %p57, %p58
    %p61 = scmp.ne.s32.totalorder %s46, %s60
    %p62 = scmp.eq.s32.totalorder %s15, 0
    %p63 = por %p61, %p62
    %s65 = sadd.s32 %s64, 1
    %p68 = scmp.eq.s32.totalorder %s9, 1
    %p69 = scmp.ne.s32.totalorder %s64, %s66
    %p70 = scmp.eq.s32.totalorder %s9, 0
    %p71 = por %p69, %p70
    %p72 = scmp.ne.s32.totalorder %s64, %s66
    %p73 = scmp.eq.s32.totalorder %s14, 1
    %p74 = por %p72, %p73
    %p75 = scmp.ne.s32.totalorder %s66, %s67
    %p76 = scmp.eq.s32.totalorder %s14, 0
    %p77 = por %p75, %p76
    %p78 = scmp.ne.s32.totalorder %s66, %s67
    %p79 = scmp.eq.s32.totalorder %s15, 1
    %p80 = por %p78, %p79
    %p82 = scmp.ne.s32.totalorder %s67, %s81
    %p83 = scmp.eq.s32.totalorder %s15, 0
    %p84 = por %p82, %p83
    %s85 = ssub.s32 %s9, %s16
    %p86 = scmp.eq.s32.totalorder %s85, 0
    %s88 = sadd.s32 %s87, 1
    %s89 = scalar_select %p86, %s87, %s88
    %p92 = pneg %p86
    %p93 = scmp.eq.s32.totalorder %s9, 1
    %p94 = por %p92, %p93
    %p95 = scmp.ne.s32.totalorder %s87, %s90
    %p96 = scmp.eq.s32.totalorder %s9, 0
    %p97 = por %p95, %p96
    %p98 = scmp.ne.s32.totalorder %s87, %s90
    %p99 = scmp.eq.s32.totalorder %s14, 1
    %p100 = por %p98, %p99
    %p101 = scmp.ne.s32.totalorder %s90, %s91
    %p102 = scmp.eq.s32.totalorder %s14, 0
    %p103 = por %p101, %p102
    %p104 = scmp.ne.s32.totalorder %s90, %s91
    %p105 = scmp.eq.s32.totalorder %s15, 1
    %p106 = por %p104, %p105
    %p108 = scmp.ne.s32.totalorder %s91, %s107
    %p109 = scmp.eq.s32.totalorder %s15, 0
    %p110 = por %p108, %p109
    %p111 = scmp.le.s32.totalorder 1, %s9
    %p112 = scmp.lt.s32.totalorder %s9, 3
    %p113 = pnand %p111, %p112
    %p114 = pneg %p113
    // Predicated region
    $region9: #{downsampling_forward.1} parent=5 // pred_check
      _
    $region10: #{downsampling_forward.1} parent=5 // pred_check_branch
      %116 = sbr.rel (%p113) target = $region12
    $region11: #{downsampling_forward.1} parent=5 // pred_region
      %s117 = ssub.s32 %s9, 1
      // Predicated region
      $region13: #{downsampling_forward.1} parent=11 // pred_check
        %p118 = pneg %p56
      $region14: #{downsampling_forward.1} parent=11 // pred_check_branch
        %120 = sbr.rel (%p118) target = $region16
      $region15: #{downsampling_forward.1} parent=11 // pred_region
        _
      $region16: #{downsampling_forward.1} parent=11 // pred_fallthru
        _
      // Predicated region
      $region17: #{downsampling_forward.1} parent=11 // pred_check
        %p121 = pneg %p77
      $region18: #{downsampling_forward.1} parent=11 // pred_check_branch
        %123 = sbr.rel (%p121) target = $region20
      $region19: #{downsampling_forward.1} parent=11 // pred_region
        _
      $region20: #{downsampling_forward.1} parent=11 // pred_fallthru
        _
    $region12: #{downsampling_forward.1} parent=5 // pred_fallthru
      _
    %p124 = scmp.lt.s32.totalorder %s9, 2
    // Predicated region
    $region21: #{downsampling_forward.1} parent=5 // pred_check
      %p125 = pneg %p124
    $region22: #{downsampling_forward.1} parent=5 // pred_check_branch
      %127 = sbr.rel (%p125) target = $region24
    $region23: #{downsampling_forward.1} parent=5 // pred_region
      // Predicated region
      $region25: #{downsampling_forward.1} parent=23 // pred_check
        %p128 = pneg %p29
      $region26: #{downsampling_forward.1} parent=23 // pred_check_branch
        %130 = sbr.rel (%p128) target = $region28
      $region27: #{downsampling_forward.1} parent=23 // pred_region
        %s131 = smul.u32 4, %s9
        %p132 = scmp.lt.s32.totalorder %s131, 7
        %s133 = scalar_select %p132, %s131, 7
        %s134 = smul.addr %s133, 4
        %s135 = smul.addr %s134, 8
        %s136 = scalar_lea.vmem %s0, %s135
        %s137 = smul.u32 4, %s9
      $region28: #{downsampling_forward.1} parent=23 // pred_fallthru
        _
    $region24: #{downsampling_forward.1} parent=5 // pred_fallthru
      _
    %p138 = scmp.le.s32.totalorder 1, %s9
    %p139 = scmp.lt.s32.totalorder %s9, 3
    %p140 = pnand %p138, %p139
    %p141 = pneg %p140
    // Predicated region
    $region29: #{downsampling_forward.1} parent=5 // pred_check
      _
    $region30: #{downsampling_forward.1} parent=5 // pred_check_branch
      %143 = sbr.rel (%p140) target = $region32
    $region31: #{downsampling_forward.1} parent=5 // pred_region
      %s144 = ssub.s32 %s9, 1
      %s145 = smul.u32 4, %s14
      %p146 = scmp.lt.s32.totalorder %s145, 7
      %s147 = scalar_select %p146, %s145, 7
      %s148 = smul.addr %s147, 4
      %s149 = smul.addr %s148, 8
      %s150 = scalar_lea.vmem %s0, %s149
      %p151 = pneg %p35
      %p152 = pneg %p32
      %p153 = pneg %p56
      %p154 = pneg %p53
      %p155 = pneg %p77
      %p156 = pneg %p74
      %p157 = pneg %p103
      %p158 = pneg %p100
      %s159 = smul.u32 4, %s14
      %p160 = scmp.lt.s32.totalorder %s159, 7
      %s161 = scalar_select %p160, %s159, 7
      %s162 = smul.addr %s161, 8
      %s163 = scalar_lea.vmem %s3, %s162
      %s164 = smul.u32 4, %s14
      %p165 = scmp.lt.s32.totalorder %s164, 7
      %s166 = scalar_select %p165, %s164, 7
      %s167 = smul.addr %s166, 4
      %s168 = smul.addr %s167, 8
      %s169 = scalar_lea.vmem %s0, %s168
      %s170 = smul.u32 4, %s14
      %s171 = smul.u32 4, %s14
      %p172 = scmp.lt.s32.totalorder %s171, 7
      %s173 = scalar_select %p172, %s171, 7
      %s174 = smul.addr %s173, 8
      %s175 = scalar_lea.vmem %s3, %s174
      %s176 = smul.u32 4, %s14
      %v177 = vld [vmem:[%s169] sm:$0xff]
      %v178 = vld [vmem:[%s169 + $0x8] sm:$0xff]
      %v179 = vld [vmem:[%s169 + $0x10] sm:$0xff]
      %v180 = vld [vmem:[%s169 + $0x18] sm:$0xff]
      %v181 = vld [vmem:[%s169 + $0x20] sm:$0xff]
      %v182 = vld [vmem:[%s169 + $0x28] sm:$0xff]
      %v183 = vld [vmem:[%s169 + $0x30] sm:$0xff]
      %v184 = vld [vmem:[%s169 + $0x38] sm:$0xff]
      %v185 = vld [vmem:[%s169 + $0x40] sm:$0xff]
      %v186 = vld [vmem:[%s169 + $0x48] sm:$0xff]
      %v187 = vld [vmem:[%s169 + $0x50] sm:$0xff]
      %v188 = vld [vmem:[%s169 + $0x58] sm:$0xff]
      %v189 = vld [vmem:[%s169 + $0x60] sm:$0xff]
      %v190 = vld [vmem:[%s169 + $0x68] sm:$0xff]
      %v191 = vld [vmem:[%s169 + $0x70] sm:$0xff]
      %v192 = vld [vmem:[%s169 + $0x78] sm:$0xff]
      %v193 = vld [vmem:[%s1] sm:$0xff]
      %v194 = vld [vmem:[%s1 + $0x8] sm:$0xff]
      %v195 = vld [vmem:[%s1 + $0x10] sm:$0xff]
      %v196 = vld [vmem:[%s1 + $0x18] sm:$0xff]
      %v197 = vld [vmem:[%s1 + $0x20] sm:$0xff]
      %v198 = vld [vmem:[%s1 + $0x28] sm:$0xff]
      %v199 = vld [vmem:[%s1 + $0x30] sm:$0xff]
      %v200 = vld [vmem:[%s1 + $0x38] sm:$0xff]
      %v201 = vld [vmem:[%s1 + $0x40] sm:$0xff]
      %v202 = vld [vmem:[%s1 + $0x48] sm:$0xff]
      %v203 = vld [vmem:[%s1 + $0x50] sm:$0xff]
      %v204 = vld [vmem:[%s1 + $0x58] sm:$0xff]
      %v205 = vld [vmem:[%s1 + $0x60] sm:$0xff]
      %v206 = vld [vmem:[%s1 + $0x68] sm:$0xff]
      %v207 = vld [vmem:[%s1 + $0x70] sm:$0xff]
      %v208 = vld [vmem:[%s1 + $0x78] sm:$0xff]
      %v209 = vld [vmem:[%s1 + $0x80] sm:$0xff]
      %v210 = vld [vmem:[%s1 + $0x88] sm:$0xff]
      %v211 = vld [vmem:[%s1 + $0x90] sm:$0xff]
      %v212 = vld [vmem:[%s1 + $0x98] sm:$0xff]
      %v213 = vld [vmem:[%s1 + $0xa0] sm:$0xff]
      %v214 = vld [vmem:[%s1 + $0xa8] sm:$0xff]
      %v215 = vld [vmem:[%s1 + $0xb0] sm:$0xff]
      %v216 = vld [vmem:[%s1 + $0xb8] sm:$0xff]
      %v217 = vld [vmem:[%s1 + $0xc0] sm:$0xff]
      %v218 = vld [vmem:[%s1 + $0xc8] sm:$0xff]
      %v219 = vld [vmem:[%s1 + $0xd0] sm:$0xff]
      %v220 = vld [vmem:[%s1 + $0xd8] sm:$0xff]
      %v221 = vld [vmem:[%s1 + $0xe0] sm:$0xff]
      %v222 = vld [vmem:[%s1 + $0xe8] sm:$0xff]
      %v223 = vld [vmem:[%s1 + $0xf0] sm:$0xff]
      %v224 = vld [vmem:[%s1 + $0xf8] sm:$0xff]
      %v225 = vld [vmem:[%s1 + $0x100] sm:$0xff]
      %v226 = vld [vmem:[%s1 + $0x108] sm:$0xff]
      %v227 = vld [vmem:[%s1 + $0x110] sm:$0xff]
      %v228 = vld [vmem:[%s1 + $0x118] sm:$0xff]
      %v229 = vld [vmem:[%s1 + $0x120] sm:$0xff]
      %v230 = vld [vmem:[%s1 + $0x128] sm:$0xff]
      %v231 = vld [vmem:[%s1 + $0x130] sm:$0xff]
      %v232 = vld [vmem:[%s1 + $0x138] sm:$0xff]
      %v233 = vld [vmem:[%s1 + $0x140] sm:$0xff]
      %v234 = vld [vmem:[%s1 + $0x148] sm:$0xff]
      %v235 = vld [vmem:[%s1 + $0x150] sm:$0xff]
      %v236 = vld [vmem:[%s1 + $0x158] sm:$0xff]
      %v237 = vld [vmem:[%s1 + $0x160] sm:$0xff]
      %v238 = vld [vmem:[%s1 + $0x168] sm:$0xff]
      %v239 = vld [vmem:[%s1 + $0x170] sm:$0xff]
      %v240 = vld [vmem:[%s1 + $0x178] sm:$0xff]
      %v241 = vld [vmem:[%s1 + $0x180] sm:$0xff]
      %v242 = vld [vmem:[%s1 + $0x188] sm:$0xff]
      %v243 = vld [vmem:[%s1 + $0x190] sm:$0xff]
      %v244 = vld [vmem:[%s1 + $0x198] sm:$0xff]
      %v245 = vld [vmem:[%s1 + $0x1a0] sm:$0xff]
      %v246 = vld [vmem:[%s1 + $0x1a8] sm:$0xff]
      %v247 = vld [vmem:[%s1 + $0x1b0] sm:$0xff]
      %v248 = vld [vmem:[%s1 + $0x1b8] sm:$0xff]
      %v249 = vld [vmem:[%s1 + $0x1c0] sm:$0xff]
      %v250 = vld [vmem:[%s1 + $0x1c8] sm:$0xff]
      %v251 = vld [vmem:[%s1 + $0x1d0] sm:$0xff]
      %v252 = vld [vmem:[%s1 + $0x1d8] sm:$0xff]
      %v253 = vld [vmem:[%s1 + $0x1e0] sm:$0xff]
      %v254 = vld [vmem:[%s1 + $0x1e8] sm:$0xff]
      %v255 = vld [vmem:[%s1 + $0x1f0] sm:$0xff]
      %v256 = vld [vmem:[%s1 + $0x1f8] sm:$0xff]
      %v257 = vld [vmem:[%s2] sm:$0x1]
      %v259 = vperm.slane %v257, 0
      %261 = vmatpush.msra.mxu0 %v208
      %262 = vmatpush.msra.mxu0 %v207
      %263 = vmatpush.msra.mxu0 %v206
      %264 = vmatpush.msra.mxu0 %v205
      %265 = vmatpush.msra.mxu0 %v204
      %266 = vmatpush.msra.mxu0 %v203
      %267 = vmatpush.msra.mxu0 %v202
      %268 = vmatpush.msra.mxu0 %v201
      %269 = vmatpush.msra.mxu0 %v200
      %270 = vmatpush.msra.mxu0 %v199
      %271 = vmatpush.msra.mxu0 %v198
      %272 = vmatpush.msra.mxu0 %v197
      %273 = vmatpush.msra.mxu0 %v196
      %274 = vmatpush.msra.mxu0 %v195
      %275 = vmatpush.msra.mxu0 %v194
      %276 = vmatpush.msra.mxu0 %v193
      %277 = vmatmul.f32.gmra.mxu0 %v177
      %v278 = vpop.f32.mrf.mxu0
      %v279 = vadd.f32 %v259, %v278
      %280 = vmatmul.f32.gmra.mxu0 %v181
      %v281 = vpop.f32.mrf.mxu0
      %v282 = vadd.f32 %v259, %v281
      %283 = vmatmul.f32.gmra.mxu0 %v185
      %v284 = vpop.f32.mrf.mxu0
      %v285 = vadd.f32 %v259, %v284
      %286 = vmatmul.f32.gmra.mxu0 %v189
      %v287 = vpop.f32.mrf.mxu0
      %v288 = vadd.f32 %v259, %v287
      %289 = vdwg.mxu0
      %290 = vmatpush.msra.mxu0 %v224
      %291 = vmatpush.msra.mxu0 %v223
      %292 = vmatpush.msra.mxu0 %v222
      %293 = vmatpush.msra.mxu0 %v221
      %294 = vmatpush.msra.mxu0 %v220
      %295 = vmatpush.msra.mxu0 %v219
      %296 = vmatpush.msra.mxu0 %v218
      %297 = vmatpush.msra.mxu0 %v217
      %298 = vmatpush.msra.mxu0 %v216
      %299 = vmatpush.msra.mxu0 %v215
      %300 = vmatpush.msra.mxu0 %v214
      %301 = vmatpush.msra.mxu0 %v213
      %302 = vmatpush.msra.mxu0 %v212
      %303 = vmatpush.msra.mxu0 %v211
      %304 = vmatpush.msra.mxu0 %v210
      %305 = vmatpush.msra.mxu0 %v209
      %306 = vmatmul.f32.gmra.mxu0 %v178
      %v307 = vpop.f32.mrf.mxu0
      %v308 = vadd.f32 %v279, %v307
      %309 = vmatmul.f32.gmra.mxu0 %v182
      %v310 = vpop.f32.mrf.mxu0
      %v311 = vadd.f32 %v282, %v310
      %312 = vmatmul.f32.gmra.mxu0 %v186
      %v313 = vpop.f32.mrf.mxu0
      %v314 = vadd.f32 %v285, %v313
      %315 = vmatmul.f32.gmra.mxu0 %v190
      %v316 = vpop.f32.mrf.mxu0
      %v317 = vadd.f32 %v288, %v316
      %318 = vdwg.mxu0
      %319 = vmatpush.msra.mxu0 %v240
      %320 = vmatpush.msra.mxu0 %v239
      %321 = vmatpush.msra.mxu0 %v238
      %322 = vmatpush.msra.mxu0 %v237
      %323 = vmatpush.msra.mxu0 %v236
      %324 = vmatpush.msra.mxu0 %v235
      %325 = vmatpush.msra.mxu0 %v234
      %326 = vmatpush.msra.mxu0 %v233
      %327 = vmatpush.msra.mxu0 %v232
      %328 = vmatpush.msra.mxu0 %v231
      %329 = vmatpush.msra.mxu0 %v230
      %330 = vmatpush.msra.mxu0 %v229
      %331 = vmatpush.msra.mxu0 %v228
      %332 = vmatpush.msra.mxu0 %v227
      %333 = vmatpush.msra.mxu0 %v226
      %334 = vmatpush.msra.mxu0 %v225
      %335 = vmatmul.f32.gmra.mxu0 %v179
      %v336 = vpop.f32.mrf.mxu0
      %v337 = vadd.f32 %v308, %v336
      %338 = vmatmul.f32.gmra.mxu0 %v183
      %v339 = vpop.f32.mrf.mxu0
      %v340 = vadd.f32 %v311, %v339
      %341 = vmatmul.f32.gmra.mxu0 %v187
      %v342 = vpop.f32.mrf.mxu0
      %v343 = vadd.f32 %v314, %v342
      %344 = vmatmul.f32.gmra.mxu0 %v191
      %v345 = vpop.f32.mrf.mxu0
      %v346 = vadd.f32 %v317, %v345
      %347 = vdwg.mxu0
      %348 = vmatpush.msra.mxu0 %v256
      %349 = vmatpush.msra.mxu0 %v255
      %350 = vmatpush.msra.mxu0 %v254
      %351 = vmatpush.msra.mxu0 %v253
      %352 = vmatpush.msra.mxu0 %v252
      %353 = vmatpush.msra.mxu0 %v251
      %354 = vmatpush.msra.mxu0 %v250
      %355 = vmatpush.msra.mxu0 %v249
      %356 = vmatpush.msra.mxu0 %v248
      %357 = vmatpush.msra.mxu0 %v247
      %358 = vmatpush.msra.mxu0 %v246
      %359 = vmatpush.msra.mxu0 %v245
      %360 = vmatpush.msra.mxu0 %v244
      %361 = vmatpush.msra.mxu0 %v243
      %362 = vmatpush.msra.mxu0 %v242
      %363 = vmatpush.msra.mxu0 %v241
      %364 = vmatmul.f32.gmra.mxu0 %v180
      %v365 = vpop.f32.mrf.mxu0
      %v366 = vadd.f32 %v337, %v365
      %367 = vmatmul.f32.gmra.mxu0 %v184
      %v368 = vpop.f32.mrf.mxu0
      %v369 = vadd.f32 %v340, %v368
      %370 = vmatmul.f32.gmra.mxu0 %v188
      %v371 = vpop.f32.mrf.mxu0
      %v372 = vadd.f32 %v343, %v371
      %373 = vmatmul.f32.gmra.mxu0 %v192
      %v374 = vpop.f32.mrf.mxu0
      %v375 = vadd.f32 %v346, %v374
      %376 = vdwg.mxu0
      %377 = vst [vmem:[%s175] sm:$0xff] %v366
      %378 = vst [vmem:[%s175 + $0x8] sm:$0xff] %v369
      %379 = vst [vmem:[%s175 + $0x10] sm:$0xff] %v372
      %380 = vst [vmem:[%s175 + $0x18] sm:$0xff] %v375
      %s381 = smul.u32 4, %s14
      %p382 = scmp.lt.s32.totalorder %s381, 7
      %s383 = scalar_select %p382, %s381, 7
      %s384 = smul.addr %s383, 8
      %s385 = scalar_lea.vmem %s3, %s384
      // Predicated region
      $region33: #{downsampling_forward.1} parent=31 // pred_check
        %p386 = pneg %p100
      $region34: #{downsampling_forward.1} parent=31 // pred_check_branch
        %388 = sbr.rel (%p386) target = $region36
      $region35: #{downsampling_forward.1} parent=31 // pred_region
        %s389 = smul.u32 4, %s14
      $region36: #{downsampling_forward.1} parent=31 // pred_fallthru
        _
    $region32: #{downsampling_forward.1} parent=5 // pred_fallthru
      _
    %p390 = scmp.le.s32.totalorder 2, %s9
    // Predicated region
    $region37: #{downsampling_forward.1} parent=5 // pred_check
      %p391 = pneg %p390
    $region38: #{downsampling_forward.1} parent=5 // pred_check_branch
      %393 = sbr.rel (%p391) target = $region40
    $region39: #{downsampling_forward.1} parent=5 // pred_region
      %s394 = ssub.s32 %s9, 2
      // Predicated region
      $region41: #{downsampling_forward.1} parent=39 // pred_check
        %p395 = pneg %p106
      $region42: #{downsampling_forward.1} parent=39 // pred_check_branch
        %397 = sbr.rel (%p395) target = $region44
      $region43: #{downsampling_forward.1} parent=39 // pred_region
        %s398 = smul.u32 4, %s15
        %p399 = scmp.lt.s32.totalorder %s398, 7
        %s400 = scalar_select %p399, %s398, 7
        %s401 = smul.addr %s400, 8
        %s402 = scalar_lea.vmem %s3, %s401
      $region44: #{downsampling_forward.1} parent=39 // pred_fallthru
        _
    $region40: #{downsampling_forward.1} parent=5 // pred_fallthru
      _
  $region6: #{downsampling_forward.1} parent=0 // loop_footer
    %s13 = sadd.s32 1, %s9
  $region7: #{downsampling_forward.1} parent=0 // loop_footer_branch
    %8 = sbr.rel target = $region3
  $region8: #{downsampling_forward.1} parent=0 // loop_exit
    _

</llo_original>
